<compile_context>
chip_gen: v5e
topology: v5e:2x2
jax: 0.10.0
libtpu: 0.0.40
codegen_flags: <defaults>
</compile_context>

<pallas_src>
import jax
import jax.numpy as jnp
from jax.experimental import pallas as pl
from jax.experimental.pallas import tpu as pltpu

# ---- hyperparameters standing in for the module's globals ----
OUT_DIM = 4
R_U_COLS = 8
IN_FEATURES = OUT_DIM * R_U_COLS      # linear1 in_features = out_dim * R_U.shape[1]
DENSE_HIDDEN1 = 64
DENSE_HIDDEN2 = 32
DENSE_OUT = 16
DROP_P = 0.5                          # F.dropout default
DROP_SCALE = 1.0 / (1.0 - DROP_P)


def _round_up(n, m):
    return ((n + m - 1) // m) * m


def _mix32(x):
    """SplitMix32-style avalanche on uint32 lanes (pure VPU int ops)."""
    x = x ^ (x >> 16)
    x = x * jnp.uint32(0x7FEB352D)
    x = x ^ (x >> 15)
    x = x * jnp.uint32(0x846CA68B)
    x = x ^ (x >> 16)
    return x


def mlp_kernel(seed_ref,                         # scalar-prefetch (SMEM)
               x_ref, w1_ref, b1_ref, w2_ref, b2_ref, w3_ref, b3_ref,
               o_ref):
    tb = x_ref.shape[0]

    # --- counter-based PRNG: one u32 per (row, hidden1) element ------------
    # Global row index keeps dropout masks distinct across batch tiles.
    rows = jax.lax.broadcasted_iota(jnp.int32, (tb, DENSE_HIDDEN1), 0)
    cols = jax.lax.broadcasted_iota(jnp.int32, (tb, DENSE_HIDDEN1), 1)
    grow = rows + pl.program_id(0) * tb
    ctr = (grow * DENSE_HIDDEN1 + cols).astype(jnp.uint32)
    seed_u = seed_ref[0].astype(jnp.uint32) * jnp.uint32(0x9E3779B9)
    bits = _mix32(ctr + seed_u)
    keep1 = (bits & jnp.uint32(1)) != 0                       # (tb, 64)
    keep2 = (bits[:, :DENSE_HIDDEN2] & jnp.uint32(2)) != 0    # (tb, 32)

    scale = jnp.float32(DROP_SCALE)

    # --- layer 1: Linear -> fused ReLU + dropout ----------------------------
    x = x_ref[...]                                            # bf16 operands
    h = jnp.dot(x, w1_ref[...], preferred_element_type=jnp.float32) + b1_ref[...]
    h = jnp.where((h > 0.0) & keep1, h * scale, 0.0)

    # --- layer 2: Linear -> fused ReLU + dropout ----------------------------
    h = jnp.dot(h.astype(jnp.bfloat16), w2_ref[...],
                preferred_element_type=jnp.float32) + b2_ref[...]
    h = jnp.where((h > 0.0) & keep2, h * scale, 0.0)

    # --- output layer --------------------------------------------------------
    o = jnp.dot(h.astype(jnp.bfloat16), w3_ref[...],
                preferred_element_type=jnp.float32) + b3_ref[...]
    o_ref[...] = o.astype(o_ref.dtype)


def user_linear(seed, x, w1, b1, w2, b2, w3, b3, *, block_b=512):
    B, F = x.shape
    assert F == IN_FEATURES

    # Batch tile: multiple of 8, capped at block_b (VMEM budget is tiny here;
    # 512 rows keeps x tiles at 32 KiB bf16, safe for v7x's 64 MiB VMEM).
    TB = min(block_b, _round_up(B, 8))
    B_pad = _round_up(B, TB)
    if B_pad != B:
        x = jnp.pad(x, ((0, B_pad - B), (0, 0)))

    # bf16 matmul operands (halves x DMA bytes); accumulation stays f32.
    x_bf = x.astype(jnp.bfloat16)
    w1b = w1.astype(jnp.bfloat16)
    w2b = w2.astype(jnp.bfloat16)
    w3b = w3.astype(jnp.bfloat16)

    def tile_spec(shape):       # indexed by batch tile
        return pl.BlockSpec(shape, lambda i, s: (i, 0))

    def resident_spec(shape):   # constant index -> stays VMEM-resident
        return pl.BlockSpec(shape, lambda i, s: (0, 0))

    grid_spec = pltpu.PrefetchScalarGridSpec(
        num_scalar_prefetch=1,
        grid=(B_pad // TB,),
        in_specs=[
            tile_spec((TB, IN_FEATURES)),
            resident_spec((IN_FEATURES, DENSE_HIDDEN1)),
            resident_spec((1, DENSE_HIDDEN1)),
            resident_spec((DENSE_HIDDEN1, DENSE_HIDDEN2)),
            resident_spec((1, DENSE_HIDDEN2)),
            resident_spec((DENSE_HIDDEN2, DENSE_OUT)),
            resident_spec((1, DENSE_OUT)),
        ],
        out_specs=tile_spec((TB, DENSE_OUT)),
    )

    out = pl.pallas_call(
        mlp_kernel,
        out_shape=jax.ShapeDtypeStruct((B_pad, DENSE_OUT), jnp.float32),
        grid_spec=grid_spec,
        compiler_params=pltpu.CompilerParams(
            dimension_semantics=("parallel",)),   # batch tiles independent -> both TCs on v7x
    )(seed, x_bf, w1b, b1, w2b, b2, w3b, b3)

    return out[:B] if B_pad != B else out


def init_params(key):
    """Deterministic parameter init (PyTorch-Linear-style uniform fan-in)."""
    ks = jax.random.split(key, 6)

    def lin(kw, kb, fan_in, fan_out):
        bound = 1.0 / jnp.sqrt(fan_in)
        # Stored as [in, out] == W^T of PyTorch's [out, in].
        w = jax.random.uniform(kw, (fan_in, fan_out), jnp.float32, -bound, bound)
        b = jax.random.uniform(kb, (1, fan_out), jnp.float32, -bound, bound)
        return w, b

    w1, b1 = lin(ks[0], ks[1], IN_FEATURES, DENSE_HIDDEN1)
    w2, b2 = lin(ks[2], ks[3], DENSE_HIDDEN1, DENSE_HIDDEN2)
    w3, b3 = lin(ks[4], ks[5], DENSE_HIDDEN2, DENSE_OUT)
    return w1, b1, w2, b2, w3, b3


if __name__ == "__main__":
    key = jax.random.PRNGKey(0)
    k_x, k_p = jax.random.split(key)

    B = 8  # batch of user embeddings
    x = jax.random.normal(k_x, (B, IN_FEATURES), jnp.float32)
    params = init_params(k_p)
    seed = jnp.array([0], dtype=jnp.int32)

    out = user_linear(seed, x, *params)
    out = jax.block_until_ready(out)
    assert out.shape == (B, DENSE_OUT) and out.dtype == jnp.float32
    print("KERNEL_OK")
</pallas_src>

<mosaic_0001>
module attributes {stable_mosaic.version = 11 : i64} {
  func.func @mlp_kernel(%arg0: i32, %arg1: memref<1xi32, #tpu.memory_space<smem>>, %arg2: memref<8x32xbf16, #tpu.memory_space<vmem>>, %arg3: memref<32x64xbf16, #tpu.memory_space<vmem>>, %arg4: memref<1x64xf32, #tpu.memory_space<vmem>>, %arg5: memref<64x32xbf16, #tpu.memory_space<vmem>>, %arg6: memref<1x32xf32, #tpu.memory_space<vmem>>, %arg7: memref<32x16xbf16, #tpu.memory_space<vmem>>, %arg8: memref<1x16xf32, #tpu.memory_space<vmem>>, %arg9: memref<8x16xf32, #tpu.memory_space<vmem>>) attributes {dimension_semantics = [#tpu.dimension_semantics<parallel>], iteration_bounds = array<i64: 1>, scalar_prefetch = 1 : i64, scratch_operands = 0 : i64, tpu.core_type = #tpu.core_type<tc>, window_params = [{transform_indices = @transform_0, window_bounds = array<i64: 8, 32>}, {pipeline_mode = #tpu.pipeline_mode<synchronous>, transform_indices = @transform_1, window_bounds = array<i64: 32, 64>}, {pipeline_mode = #tpu.pipeline_mode<synchronous>, transform_indices = @transform_2, window_bounds = array<i64: 1, 64>}, {pipeline_mode = #tpu.pipeline_mode<synchronous>, transform_indices = @transform_3, window_bounds = array<i64: 64, 32>}, {pipeline_mode = #tpu.pipeline_mode<synchronous>, transform_indices = @transform_4, window_bounds = array<i64: 1, 32>}, {pipeline_mode = #tpu.pipeline_mode<synchronous>, transform_indices = @transform_5, window_bounds = array<i64: 32, 16>}, {pipeline_mode = #tpu.pipeline_mode<synchronous>, transform_indices = @transform_6, window_bounds = array<i64: 1, 16>}, {transform_indices = @transform_7, window_bounds = array<i64: 8, 16>}]} {
    %0 = tpu.iota {dimensions = array<i32: 0>} : vector<8x64xi32>
    %1 = tpu.iota {dimensions = array<i32: 1>} : vector<8x64xi32>
    %c8_i32 = arith.constant 8 : i32
    %2 = arith.muli %arg0, %c8_i32 : i32
    %3 = vector.broadcast %2 : i32 to vector<8x64xi32>
    %4 = arith.addi %0, %3 : vector<8x64xi32>
    %c64_i32 = arith.constant 64 : i32
    %5 = vector.broadcast %c64_i32 : i32 to vector<8x64xi32>
    %6 = arith.muli %4, %5 : vector<8x64xi32>
    %7 = arith.addi %6, %1 : vector<8x64xi32>
    %c0 = arith.constant 0 : index
    %8 = memref.load %arg1[%c0] : memref<1xi32, #tpu.memory_space<smem>>
    %c-1640531527_i32 = arith.constant -1640531527 : i32
    %9 = arith.muli %8, %c-1640531527_i32 : i32
    %10 = vector.broadcast %9 : i32 to vector<8x64xi32>
    %11 = arith.addi %7, %10 : vector<8x64xi32>
    %c16_i32 = arith.constant 16 : i32
    %12 = vector.broadcast %c16_i32 : i32 to vector<8x64xi32>
    %13 = arith.shrui %11, %12 : vector<8x64xi32>
    %14 = arith.xori %11, %13 : vector<8x64xi32>
    %c2146121005_i32 = arith.constant 2146121005 : i32
    %15 = vector.broadcast %c2146121005_i32 : i32 to vector<8x64xi32>
    %16 = arith.muli %14, %15 : vector<8x64xi32>
    %c15_i32 = arith.constant 15 : i32
    %17 = vector.broadcast %c15_i32 : i32 to vector<8x64xi32>
    %18 = arith.shrui %16, %17 : vector<8x64xi32>
    %19 = arith.xori %16, %18 : vector<8x64xi32>
    %c-2073254261_i32 = arith.constant -2073254261 : i32
    %20 = vector.broadcast %c-2073254261_i32 : i32 to vector<8x64xi32>
    %21 = arith.muli %19, %20 : vector<8x64xi32>
    %c16_i32_0 = arith.constant 16 : i32
    %22 = vector.broadcast %c16_i32_0 : i32 to vector<8x64xi32>
    %23 = arith.shrui %21, %22 : vector<8x64xi32>
    %24 = arith.xori %21, %23 : vector<8x64xi32>
    %c1_i32 = arith.constant 1 : i32
    %25 = vector.broadcast %c1_i32 : i32 to vector<8x64xi32>
    %26 = arith.andi %24, %25 : vector<8x64xi32>
    %c0_i32 = arith.constant 0 : i32
    %27 = vector.broadcast %c0_i32 : i32 to vector<8x64xi32>
    %28 = arith.cmpi ne, %26, %27 : vector<8x64xi32>
    %29 = vector.extract_strided_slice %24 {offsets = [0, 0], sizes = [8, 32], strides = [1, 1]} : vector<8x64xi32> to vector<8x32xi32>
    %c2_i32 = arith.constant 2 : i32
    %30 = vector.broadcast %c2_i32 : i32 to vector<8x32xi32>
    %31 = arith.andi %29, %30 : vector<8x32xi32>
    %c0_i32_1 = arith.constant 0 : i32
    %32 = vector.broadcast %c0_i32_1 : i32 to vector<8x32xi32>
    %33 = arith.cmpi ne, %31, %32 : vector<8x32xi32>
    %c0_2 = arith.constant 0 : index
    %c0_3 = arith.constant 0 : index
    %34 = vector.load %arg2[%c0_2, %c0_3] : memref<8x32xbf16, #tpu.memory_space<vmem>>, vector<8x32xbf16>
    %c0_4 = arith.constant 0 : index
    %c0_5 = arith.constant 0 : index
    %35 = vector.load %arg3[%c0_4, %c0_5] : memref<32x64xbf16, #tpu.memory_space<vmem>>, vector<32x64xbf16>
    %cst = arith.constant dense<0.000000e+00> : vector<8x64xf32>
    %36 = tpu.matmul %34, %35, %cst {dimension_numbers = #tpu.dot_dimension_numbers<[1], [0], [0], [1], [0, 0, 1, 1], [], []>} : vector<8x32xbf16>, vector<32x64xbf16>, vector<8x64xf32> -> vector<8x64xf32>
    %c0_6 = arith.constant 0 : index
    %c0_7 = arith.constant 0 : index
    %37 = vector.load %arg4[%c0_6, %c0_7] : memref<1x64xf32, #tpu.memory_space<vmem>>, vector<1x64xf32>
    %38 = vector.broadcast %37 : vector<1x64xf32> to vector<8x64xf32>
    %39 = arith.addf %36, %38 : vector<8x64xf32>
    %cst_8 = arith.constant 0.000000e+00 : f32
    %40 = vector.broadcast %cst_8 : f32 to vector<8x64xf32>
    %41 = arith.cmpf ogt, %39, %40 : vector<8x64xf32>
    %42 = arith.andi %41, %28 : vector<8x64xi1>
    %cst_9 = arith.constant 2.000000e+00 : f32
    %43 = vector.broadcast %cst_9 : f32 to vector<8x64xf32>
    %44 = arith.mulf %39, %43 : vector<8x64xf32>
    %cst_10 = arith.constant 0.000000e+00 : f32
    %45 = vector.broadcast %cst_10 : f32 to vector<8x64xf32>
    %46 = arith.select %42, %44, %45 : vector<8x64xi1>, vector<8x64xf32>
    %47 = arith.truncf %46 : vector<8x64xf32> to vector<8x64xbf16>
    %c0_11 = arith.constant 0 : index
    %c0_12 = arith.constant 0 : index
    %48 = vector.load %arg5[%c0_11, %c0_12] : memref<64x32xbf16, #tpu.memory_space<vmem>>, vector<64x32xbf16>
    %cst_13 = arith.constant dense<0.000000e+00> : vector<8x32xf32>
    %49 = tpu.matmul %47, %48, %cst_13 {dimension_numbers = #tpu.dot_dimension_numbers<[1], [0], [0], [1], [0, 0, 1, 1], [], []>} : vector<8x64xbf16>, vector<64x32xbf16>, vector<8x32xf32> -> vector<8x32xf32>
    %c0_14 = arith.constant 0 : index
    %c0_15 = arith.constant 0 : index
    %50 = vector.load %arg6[%c0_14, %c0_15] : memref<1x32xf32, #tpu.memory_space<vmem>>, vector<1x32xf32>
    %51 = vector.broadcast %50 : vector<1x32xf32> to vector<8x32xf32>
    %52 = arith.addf %49, %51 : vector<8x32xf32>
    %cst_16 = arith.constant 0.000000e+00 : f32
    %53 = vector.broadcast %cst_16 : f32 to vector<8x32xf32>
    %54 = arith.cmpf ogt, %52, %53 : vector<8x32xf32>
    %55 = arith.andi %54, %33 : vector<8x32xi1>
    %cst_17 = arith.constant 2.000000e+00 : f32
    %56 = vector.broadcast %cst_17 : f32 to vector<8x32xf32>
    %57 = arith.mulf %52, %56 : vector<8x32xf32>
    %cst_18 = arith.constant 0.000000e+00 : f32
    %58 = vector.broadcast %cst_18 : f32 to vector<8x32xf32>
    %59 = arith.select %55, %57, %58 : vector<8x32xi1>, vector<8x32xf32>
    %60 = arith.truncf %59 : vector<8x32xf32> to vector<8x32xbf16>
    %c0_19 = arith.constant 0 : index
    %c0_20 = arith.constant 0 : index
    %61 = vector.load %arg7[%c0_19, %c0_20] : memref<32x16xbf16, #tpu.memory_space<vmem>>, vector<32x16xbf16>
    %cst_21 = arith.constant dense<0.000000e+00> : vector<8x16xf32>
    %62 = tpu.matmul %60, %61, %cst_21 {dimension_numbers = #tpu.dot_dimension_numbers<[1], [0], [0], [1], [0, 0, 1, 1], [], []>} : vector<8x32xbf16>, vector<32x16xbf16>, vector<8x16xf32> -> vector<8x16xf32>
    %c0_22 = arith.constant 0 : index
    %c0_23 = arith.constant 0 : index
    %63 = vector.load %arg8[%c0_22, %c0_23] : memref<1x16xf32, #tpu.memory_space<vmem>>, vector<1x16xf32>
    %64 = vector.broadcast %63 : vector<1x16xf32> to vector<8x16xf32>
    %65 = arith.addf %62, %64 : vector<8x16xf32>
    %c0_24 = arith.constant 0 : index
    %c0_25 = arith.constant 0 : index
    %66 = vector.load %arg9[%c0_24, %c0_25] : memref<8x16xf32, #tpu.memory_space<vmem>>, vector<8x16xf32>
    tpu.vector_store %arg9[%c0_24, %c0_25], %65 {strides = array<i32>} : memref<8x16xf32, #tpu.memory_space<vmem>>, vector<8x16xf32>,
    return
  }
  func.func @transform_0(%arg0: i32, %arg1: memref<1xi32, #tpu.memory_space<smem>>) -> (i32, i32) {
    %c0_i32 = arith.constant 0 : i32
    %c0_i32_0 = arith.constant 0 : i32
    return %arg0, %c0_i32 : i32, i32
  }
  func.func @transform_1(%arg0: i32, %arg1: memref<1xi32, #tpu.memory_space<smem>>) -> (i32, i32) {
    %c0_i32 = arith.constant 0 : i32
    %c0_i32_0 = arith.constant 0 : i32
    %c0_i32_1 = arith.constant 0 : i32
    return %c0_i32, %c0_i32_0 : i32, i32
  }
  func.func @transform_2(%arg0: i32, %arg1: memref<1xi32, #tpu.memory_space<smem>>) -> (i32, i32) {
    %c0_i32 = arith.constant 0 : i32
    %c0_i32_0 = arith.constant 0 : i32
    %c0_i32_1 = arith.constant 0 : i32
    return %c0_i32, %c0_i32_0 : i32, i32
  }
  func.func @transform_3(%arg0: i32, %arg1: memref<1xi32, #tpu.memory_space<smem>>) -> (i32, i32) {
    %c0_i32 = arith.constant 0 : i32
    %c0_i32_0 = arith.constant 0 : i32
    %c0_i32_1 = arith.constant 0 : i32
    return %c0_i32, %c0_i32_0 : i32, i32
  }
  func.func @transform_4(%arg0: i32, %arg1: memref<1xi32, #tpu.memory_space<smem>>) -> (i32, i32) {
    %c0_i32 = arith.constant 0 : i32
    %c0_i32_0 = arith.constant 0 : i32
    %c0_i32_1 = arith.constant 0 : i32
    return %c0_i32, %c0_i32_0 : i32, i32
  }
  func.func @transform_5(%arg0: i32, %arg1: memref<1xi32, #tpu.memory_space<smem>>) -> (i32, i32) {
    %c0_i32 = arith.constant 0 : i32
    %c0_i32_0 = arith.constant 0 : i32
    %c0_i32_1 = arith.constant 0 : i32
    return %c0_i32, %c0_i32_0 : i32, i32
  }
  func.func @transform_6(%arg0: i32, %arg1: memref<1xi32, #tpu.memory_space<smem>>) -> (i32, i32) {
    %c0_i32 = arith.constant 0 : i32
    %c0_i32_0 = arith.constant 0 : i32
    %c0_i32_1 = arith.constant 0 : i32
    return %c0_i32, %c0_i32_0 : i32, i32
  }
  func.func @transform_7(%arg0: i32, %arg1: memref<1xi32, #tpu.memory_space<smem>>) -> (i32, i32) {
    %c0_i32 = arith.constant 0 : i32
    %c0_i32_0 = arith.constant 0 : i32
    return %arg0, %c0_i32 : i32, i32
  }
}

</mosaic_0001>

<llo_original>
// kernel: tpu_custom_call.1
$region0: #{tpu_custom_call.1}
  #allocation0 [shape = 'u32[]', space=smem, size = 0x4, offset = 0x4, fixed_abs, tag = 'smem constant byte address 0x4 - core index']
  #allocation1 [shape = 'u32[72,128]{1,0:T(1,128)}', space=vmem, size = 0x9000, scoped, tag = 'internal scratch']
  #allocation2 [shape = 's32[1]{0}', space=sflag, size = 0x4, scoped, tag = 'scoped memory for tpu_custom_call.1']
  #allocation3 [shape = 's32[1]{0:T(128)S(6)}', space=smem, size = 0x200, scoped, tag = 'prefetched SMEM operand 0']
  %s0 = inlined_call_operand.<no memory space> [shape: s32[1], index: 0, kind: input, shape index: {}]
  %s1 = inlined_call_operand.vmem [shape: bf16[8,32], index: 1, kind: input, shape index: {}]
  %s2 = inlined_call_operand.vmem [shape: bf16[32,64], index: 2, kind: input, shape index: {}]
  %s3 = inlined_call_operand.vmem [shape: f32[1,64], index: 3, kind: input, shape index: {}]
  %s4 = inlined_call_operand.vmem [shape: bf16[64,32], index: 4, kind: input, shape index: {}]
  %s5 = inlined_call_operand.vmem [shape: f32[1,32], index: 5, kind: input, shape index: {}]
  %s6 = inlined_call_operand.vmem [shape: bf16[32,16], index: 6, kind: input, shape index: {}]
  %s7 = inlined_call_operand.vmem [shape: f32[1,16], index: 7, kind: input, shape index: {}]
  %s8 = inlined_call_operand.hbm [shape: f32[8,16], index: 8, kind: output, shape index: {}]
  %s9 = sld [smem:[#allocation0]]
  $region38: #{tpu_custom_call.1} parent=0
    _
  %s11 = ssub.s32 1, %s9
  %s12 = scalar_select 0, %s11, %s9
  %13 = sst [smem:[#allocation3]] %s0
  $region1: #{tpu_custom_call.1} parent=0
    #allocation4 [shape = 'u8[4096]{0}', space=vmem, size = 0x1000, scoped, tag = 'output window, operand 0, single buffered']
    #allocation5 [shape = 's32[1]{0}', space=sflag, size = 0x4, scoped, tag = 'scoped memory for tpu_custom_call.1']
    %14 = vsyncpa [#allocation5], 0
    // Predicated region
    $region2: #{tpu_custom_call.1} parent=1 // pred_check
      _
    $region3: #{tpu_custom_call.1} parent=1 // pred_check_branch
      %16 = sbr.rel (0) target = $region5
    $region4: #{tpu_custom_call.1} parent=1 // pred_region
      _
    $region5: #{tpu_custom_call.1} parent=1 // pred_fallthru
      _
    // Predicated region
    $region6: #{tpu_custom_call.1} parent=1 // pred_check
      _
    $region7: #{tpu_custom_call.1} parent=1 // pred_check_branch
      %18 = sbr.rel (0) target = $region9
    $region8: #{tpu_custom_call.1} parent=1 // pred_region
      _
    $region9: #{tpu_custom_call.1} parent=1 // pred_fallthru
      _
    // Predicated region
    $region10: #{tpu_custom_call.1} parent=1 // pred_check
      _
    $region11: #{tpu_custom_call.1} parent=1 // pred_check_branch
      %20 = sbr.rel (0) target = $region13
    $region12: #{tpu_custom_call.1} parent=1 // pred_region
      _
    $region13: #{tpu_custom_call.1} parent=1 // pred_fallthru
      _
    // Predicated region
    $region14: #{tpu_custom_call.1} parent=1 // pred_check
      _
    $region15: #{tpu_custom_call.1} parent=1 // pred_check_branch
      %22 = sbr.rel (0) target = $region17
    $region16: #{tpu_custom_call.1} parent=1 // pred_region
      _
    $region17: #{tpu_custom_call.1} parent=1 // pred_fallthru
      _
    // Predicated region
    $region18: #{tpu_custom_call.1} parent=1 // pred_check
      _
    $region19: #{tpu_custom_call.1} parent=1 // pred_check_branch
      %24 = sbr.rel (0) target = $region21
    $region20: #{tpu_custom_call.1} parent=1 // pred_region
      _
    $region21: #{tpu_custom_call.1} parent=1 // pred_fallthru
      _
    // Predicated region
    $region22: #{tpu_custom_call.1} parent=1 // pred_check
      _
    $region23: #{tpu_custom_call.1} parent=1 // pred_check_branch
      %26 = sbr.rel (0) target = $region25
    $region24: #{tpu_custom_call.1} parent=1 // pred_region
      _
    $region25: #{tpu_custom_call.1} parent=1 // pred_fallthru
      _
    // Predicated region
    $region26: #{tpu_custom_call.1} parent=1 // pred_check
      _
    $region27: #{tpu_custom_call.1} parent=1 // pred_check_branch
      %28 = sbr.rel (0) target = $region29
    $region28: #{tpu_custom_call.1} parent=1 // pred_region
      _
    $region29: #{tpu_custom_call.1} parent=1 // pred_fallthru
      _
    %v30 = vlaneseq
    %v31 = vshrl.u32 %v30, 7
    %v32 = vlaneseq
    %v33 = vand.u32 %v32, 127
    %s34 = smul.u32 0, 8
    %v35 = vstv %s34
    %v36 = vadd.s32 %v31, %v35
    %v37 = vmul.u32 %v36, 64
    %v38 = vadd.s32 %v37, %v33
    %s39 = sld [smem:[#allocation3]]
    %s40 = smul.u32 %s39, 2654435769
    %v41 = vstv %s40
    %v42 = vadd.s32 %v38, %v41
    %v43 = vshrl.u32 %v42, 16
    %v44 = vxor.u32 %v42, %v43
    %v45 = vmul.u32 %v44, 2146121005
    %v46 = vshrl.u32 %v45, 15
    %v47 = vxor.u32 %v45, %v46
    %v48 = vmul.u32 %v47, 2221713035
    %v49 = vshrl.u32 %v48, 16
    %v50 = vxor.u32 %v48, %v49
    %v51 = vand.u32 %v50, 1
    %vm52 = vcmp.ne.s32.totalorder %v51, 0
    %v53 = vand.u32 %v50, 2
    %vm54 = vcmp.ne.s32.totalorder %v53, 0
    %v55 = vld [vmem:[%s1] sm:$0xf]
    %v56 = vld [vmem:[%s2] sm:$0xf]
    %v57 = vld [vmem:[%s2 + $0x4] sm:$0xf]
    %v58 = vld [vmem:[%s2 + $0x8] sm:$0xf]
    %v59 = vld [vmem:[%s2 + $0xc] sm:$0xf]
    %v60 = vld [vmem:[%s3] sm:$0x1]
    %v62 = vperm.slane %v60, 0
    %v68 = vunpack.c.l.b16 %v56
    %v69 = vunpack.c.l.b16 %v57
    %v70 = vunpack.c.l.b16 %v58
    %v71 = vunpack.c.l.b16 %v59
    %v72 = vpack.c.b16 %v69, %v68
    %v73 = vpack.c.b16 %v71, %v70
    %vm76 = vcmask 261120
    %v78 = vsel %vm76, %v55, 0
    %80 = vmatpush.bf16.msra.mxu0 0
    %81 = vmatpush.bf16.msra.mxu0 0
    %82 = vmatpush.bf16.msra.mxu0 0
    %83 = vmatpush.bf16.msra.mxu0 0
    %84 = vmatpush.bf16.msra.mxu0 0
    %85 = vmatpush.bf16.msra.mxu0 0
    %86 = vmatpush.bf16.msra.mxu0 %v73
    %87 = vmatpush.bf16.msra.mxu0 %v72
    %88 = vmatmul.bf16.gmra.mxu0 %v78
    %v89 = vpop.f32.mrf.mxu0
    %v90 = vadd.f32 %v62, %v89
    %v91 = vpop.f32.mrf.mxu0
    %92 = vdwg.mxu0
    %vm93 = vcmp.gt.f32.partialorder %v90, 0.0
    %vm94 = vmand %vm93, %vm52
    %v95 = vmul.f32 %v90, 2.0
    %v96 = vsel %vm94, %v95, 0.0
    %v97 = vpack.c.bf16 %v96, %v96
    %v98 = vld [vmem:[%s4] sm:$0xf]
    %v99 = vld [vmem:[%s4 + $0x4] sm:$0xf]
    %v100 = vld [vmem:[%s4 + $0x8] sm:$0xf]
    %v101 = vld [vmem:[%s4 + $0xc] sm:$0xf]
    %v102 = vld [vmem:[%s4 + $0x10] sm:$0xf]
    %v103 = vld [vmem:[%s4 + $0x14] sm:$0xf]
    %v104 = vld [vmem:[%s4 + $0x18] sm:$0xf]
    %v105 = vld [vmem:[%s4 + $0x1c] sm:$0xf]
    %v106 = vld [vmem:[%s5] sm:$0x1]
    %v108 = vperm.slane %v106, 0
    %v118 = vunpack.c.l.b16 %v98
    %v119 = vunpack.c.l.b16 %v99
    %v120 = vunpack.c.l.b16 %v100
    %v121 = vunpack.c.l.b16 %v101
    %v122 = vunpack.c.l.b16 %v102
    %v123 = vunpack.c.l.b16 %v103
    %v124 = vunpack.c.l.b16 %v104
    %v125 = vunpack.c.l.b16 %v105
    %v126 = vpack.c.b16 %v119, %v118
    %v127 = vpack.c.b16 %v121, %v120
    %v128 = vpack.c.b16 %v123, %v122
    %v129 = vpack.c.b16 %v125, %v124
    %vm134 = vcmask 523264
    %v136 = vsel %vm134, %v97, 0
    %138 = vmatpush.bf16.msra.mxu0 0
    %139 = vmatpush.bf16.msra.mxu0 0
    %140 = vmatpush.bf16.msra.mxu0 0
    %141 = vmatpush.bf16.msra.mxu0 0
    %142 = vmatpush.bf16.msra.mxu0 %v129
    %143 = vmatpush.bf16.msra.mxu0 %v128
    %144 = vmatpush.bf16.msra.mxu0 %v127
    %145 = vmatpush.bf16.msra.mxu0 %v126
    %146 = vmatmul.bf16.gmra.mxu0 %v136
    %v147 = vpop.f32.mrf.mxu0
    %v148 = vadd.f32 %v108, %v147
    %v149 = vpop.f32.mrf.mxu0
    %150 = vdwg.mxu0
    %vm151 = vcmp.gt.f32.partialorder %v148, 0.0
    %vm152 = vmand %vm151, %vm54
    %v153 = vmul.f32 %v148, 2.0
    %v154 = vsel %vm152, %v153, 0.0
    %v155 = vpack.c.bf16 %v154, %v154
    %v156 = vld [vmem:[%s6] sm:$0xf]
    %v157 = vld [vmem:[%s6 + $0x4] sm:$0xf]
    %v158 = vld [vmem:[%s6 + $0x8] sm:$0xf]
    %v159 = vld [vmem:[%s6 + $0xc] sm:$0xf]
    %v160 = vld [vmem:[%s7] sm:$0x1]
    %v162 = vperm.slane %v160, 0
    %v168 = vunpack.c.l.b16 %v156
    %v169 = vunpack.c.l.b16 %v157
    %v170 = vunpack.c.l.b16 %v158
    %v171 = vunpack.c.l.b16 %v159
    %v172 = vpack.c.b16 %v169, %v168
    %v173 = vpack.c.b16 %v171, %v170
    %v177 = vsel %vm76, %v155, 0
    %179 = vmatpush.bf16.msra.mxu0 0
    %180 = vmatpush.bf16.msra.mxu0 0
    %181 = vmatpush.bf16.msra.mxu0 0
    %182 = vmatpush.bf16.msra.mxu0 0
    %183 = vmatpush.bf16.msra.mxu0 0
    %184 = vmatpush.bf16.msra.mxu0 0
    %185 = vmatpush.bf16.msra.mxu0 %v173
    %186 = vmatpush.bf16.msra.mxu0 %v172
    %187 = vmatmul.bf16.gmra.mxu0 %v177
    %v188 = vpop.f32.mrf.mxu0
    %v189 = vadd.f32 %v162, %v188
    %v190 = vpop.f32.mrf.mxu0
    %191 = vdwg.mxu0
    %vm192 = vcmask 130048
    %193 = vst.msk [vmem:[#allocation4] sm:$0xff] %vm192, %v189
    // Predicated region
    $region30: #{tpu_custom_call.1} parent=1 // pred_check
      _
    $region31: #{tpu_custom_call.1} parent=1 // pred_check_branch
      %195 = sbr.rel (0) target = $region33
    $region32: #{tpu_custom_call.1} parent=1 // pred_region
      %197 = vsyncadd [#allocation5], 0
      %s199 = sshll.u32 [#allocation4], 4
      %s200 = int_to_ptr.vmem [resolvable:$true] %s199
      %s201 = sshll.u32 %s8, 4
      %s202 = int_to_ptr.hbm [resolvable:$true] %s201
      %204 = dma.vmem_to_hbm [thread:$0]  %s200, 128, %s202, [#allocation5]
    $region33: #{tpu_custom_call.1} parent=1 // pred_fallthru
      _
    // Predicated region
    $region34: #{tpu_custom_call.1} parent=1 // pred_check
      _
    $region35: #{tpu_custom_call.1} parent=1 // pred_check_branch
      %206 = sbr.rel (0) target = $region37
    $region36: #{tpu_custom_call.1} parent=1 // pred_region
      %208 = dma.done [#allocation5], 128
    $region37: #{tpu_custom_call.1} parent=1 // pred_fallthru
      _
    %209 = vsyncpa [#allocation5], 1

</llo_original>
